<compile_context>
chip_gen: v5e
topology: v5e:2x2
jax: 0.10.0
libtpu: 0.0.40
codegen_flags: <defaults>
</compile_context>

<pallas_src>
import numpy as np
import jax
import jax.numpy as jnp
from jax.experimental import pallas as pl
from jax.experimental.pallas import tpu as pltpu


def _round_up(x, m):
    return ((x + m - 1) // m) * m


def _cdiv(a, b):
    return (a + b - 1) // b


# ----------------------------------------------------------------------------
# Deterministic parameter construction (numpy glue): librosa mel filterbank
# (htk=True, slaney norm) and torch.hann_window, exactly as the torch module.
# ----------------------------------------------------------------------------
def _hz_to_mel_htk(f):
    return 2595.0 * np.log10(1.0 + np.asarray(f, dtype=np.float64) / 700.0)


def _mel_to_hz_htk(m):
    return 700.0 * (10.0 ** (np.asarray(m, dtype=np.float64) / 2595.0) - 1.0)


def mel_filterbank(sr, n_fft, n_mels, fmin=0.0, fmax=None):
    if fmax is None:
        fmax = sr / 2.0
    n_freq = n_fft // 2 + 1
    fftfreqs = np.linspace(0.0, sr / 2.0, n_freq)
    min_mel = _hz_to_mel_htk(fmin)
    max_mel = _hz_to_mel_htk(fmax)
    mels = np.linspace(min_mel, max_mel, n_mels + 2)
    mel_f = _mel_to_hz_htk(mels)
    fdiff = np.diff(mel_f)
    ramps = mel_f[:, None] - fftfreqs[None, :]
    lower = -ramps[:-2] / fdiff[:-1, None]
    upper = ramps[2:] / fdiff[1:, None]
    weights = np.maximum(0.0, np.minimum(lower, upper))
    enorm = 2.0 / (mel_f[2:n_mels + 2] - mel_f[:n_mels])   # slaney norm
    weights = weights * enorm[:, None]
    return weights.astype(np.float32)                       # (n_mels, n_freq)


def hann_window(win_length):
    # torch.hann_window default is periodic=True
    n = np.arange(win_length, dtype=np.float64)
    return 0.5 - 0.5 * np.cos(2.0 * np.pi * n / win_length)


def dft_matrices(n_fft, win_length):
    """Windowed one-sided DFT matrices: frames @ wr -> real, frames @ wi -> imag."""
    win = hann_window(win_length)
    if win_length < n_fft:
        w = np.zeros(n_fft, dtype=np.float64)
        off = (n_fft - win_length) // 2
        w[off:off + win_length] = win
    else:
        w = win
    n_freq = n_fft // 2 + 1
    n = np.arange(n_fft)[:, None]
    k = np.arange(n_freq)[None, :]
    ang = 2.0 * np.pi * n * k / n_fft
    wr = (w[:, None] * np.cos(ang)).astype(np.float32)      # (n_fft, n_freq)
    wi = (-w[:, None] * np.sin(ang)).astype(np.float32)     # (n_fft, n_freq)
    return wr, wi


# ----------------------------------------------------------------------------
# Pallas kernel: assemble the sample span for TM frames from two chunk blocks,
# accumulate the windowed DFT over hop-sized K slices, magnitude, mel matmul,
# log(clamp(.)).  Lane dims (2*Fp, Mp) are padded to multiples of 128.
# ----------------------------------------------------------------------------
def _make_melspec_kernel(clamp, fp, n_hops, hop, tm, compute_dtype):
    def kernel(a_ref, b_ref, w_ref, melT_ref, out_ref, span_ref):
        # span row c = padded_audio[(i*TM + c)*hop : (i*TM + c + 1)*hop]
        span_ref[:tm, :] = a_ref[0]
        span_ref[tm:, :] = b_ref[0]

        # Frame r = span rows r .. r+n_hops-1.  y = frames @ [wr | wi],
        # accumulated over j so every LHS slice is a contiguous (TM, hop)
        # block of the span (no gather, no relayout-heavy writes).
        def dft_chunk(j):
            return jnp.dot(span_ref[j:j + tm, :],
                           w_ref[j * hop:(j + 1) * hop, :],
                           preferred_element_type=jnp.float32)

        y = dft_chunk(0)
        for j in range(1, n_hops):                          # static unroll
            y = y + dft_chunk(j)

        re = y[:, :fp]
        im = y[:, fp:]
        mag = jnp.sqrt(re * re + im * im)                   # (TM, Fp) f32
        mel = jnp.dot(mag.astype(compute_dtype), melT_ref[...],
                      preferred_element_type=jnp.float32)   # (TM, Mp) f32
        out_ref[0] = jnp.log(jnp.maximum(mel, clamp))
    return kernel


def _const_spec(shape):
    """Grid-invariant operand; single-buffer it if this JAX supports Buffered."""
    index_map = lambda b, i: (0, 0)
    try:
        return pl.BlockSpec(shape, index_map, pipeline_mode=pl.Buffered(1))
    except TypeError:
        return pl.BlockSpec(shape, index_map)


class MelSpectrogramPallas:
    def __init__(self, n_mel_channels, sample_rate, win_length, hop_length,
                 n_fft=None, mel_fmin=0, mel_fmax=None, clamp=1e-5,
                 compute_dtype=jnp.bfloat16, tile_rows=256):
        n_fft = win_length if n_fft is None else n_fft
        self.n_fft = n_fft
        self.win_length = win_length
        self.hop_length = hop_length
        self.n_mel_channels = n_mel_channels
        self.clamp = float(clamp)
        self.compute_dtype = compute_dtype
        self.tile_rows = int(tile_rows)

        n_freq = n_fft // 2 + 1
        self.n_freq = n_freq
        self.n_freq_pad = _round_up(n_freq, 128)            # lane-dense
        self.n_mels_pad = _round_up(n_mel_channels, 128)    # lane-dense

        # Zero-pad the frame axis of W to a multiple of hop so in-kernel
        # framing works for any hop (the extra rows contribute nothing).
        self.n_fft_eff = _round_up(n_fft, hop_length)
        self.n_hops = self.n_fft_eff // hop_length

        mel_basis = mel_filterbank(sample_rate, n_fft, n_mel_channels,
                                   fmin=mel_fmin, fmax=mel_fmax)   # (M, F)
        wr, wi = dft_matrices(n_fft, win_length)                   # (n_fft, F)

        W = np.zeros((self.n_fft_eff, 2 * self.n_freq_pad), np.float32)
        W[:n_fft, :n_freq] = wr
        W[:n_fft, self.n_freq_pad:self.n_freq_pad + n_freq] = wi
        melT = np.zeros((self.n_freq_pad, self.n_mels_pad), np.float32)
        melT[:n_freq, :n_mel_channels] = mel_basis.T

        # bf16 operands, f32 MXU accumulation (mag/log stay f32).  NOTE: the
        # mag -> compute_dtype cast before the mel matmul is a second rounding
        # stage; use compute_dtype=jnp.float32 for strict torch parity.
        self.W = jnp.asarray(W, dtype=compute_dtype)        # (n_fft_eff, 2*Fp)
        self.melT = jnp.asarray(melT, dtype=compute_dtype)  # (Fp, Mp)

    # -- helpers -------------------------------------------------------------
    def _num_frames(self, L):
        return (L + 2 * (self.n_fft // 2) - self.n_fft) // self.hop_length + 1

    def _pick_tile(self, B, n_frames):
        tm = min(self.tile_rows, _round_up(n_frames, 16))
        tm = max(_round_up(tm, 16), _round_up(self.n_hops, 16))
        # keep >= 2 (parallel) grid steps so v7x's second TensorCore has work
        if B * _cdiv(n_frames, tm) < 2 and n_frames > 16:
            tm = max(_round_up(_cdiv(n_frames, 2), 16),
                     _round_up(self.n_hops, 16))
        return tm

    # -- forward -------------------------------------------------------------
    def __call__(self, audio):
        # audio: (B, L) float32
        # TODO(synk): only the keyshift=0 / speed=1 / center=True path of the
        # torch module is implemented (other paths change n_fft/hop at runtime).
        B, L = audio.shape
        hop = self.hop_length
        Fp, Mp = self.n_freq_pad, self.n_mels_pad
        pad = self.n_fft // 2
        if L <= pad:
            raise ValueError(
                f"audio length {L} must exceed n_fft//2={pad} for reflect "
                "padding (same constraint as torch.stft)")

        n_frames = self._num_frames(L)
        TM = self._pick_tile(B, n_frames)
        t_tiles = _cdiv(n_frames, TM)

        # Reflect pad (torch.stft center=True), cast once to compute dtype,
        # zero-extend to whole hop-sized chunks covering every tile's span,
        # and view as (B, chunks, hop).  No overlapping frames materialized.
        audio_p = jnp.pad(audio, ((0, 0), (pad, pad)), mode="reflect")
        audio_p = audio_p.astype(self.compute_dtype)
        n_chunks = (t_tiles + 1) * TM
        total_len = n_chunks * hop
        assert total_len >= audio_p.shape[1]
        audio_p = jnp.pad(audio_p, ((0, 0), (0, total_len - audio_p.shape[1])))
        chunks = audio_p.reshape(B, n_chunks, hop)

        # VMEM budget: pipelined chunk blocks + weights + output + scratch +
        # f32 intermediates, + headroom, capped for v7x's 64 MiB VMEM.
        it = jnp.dtype(self.compute_dtype).itemsize
        est = (2 * 2 * TM * hop * it              # two chunk inputs, 2 bufs
               + 2 * self.W.size * it             # W (conservative: 2 bufs)
               + 2 * self.melT.size * it          # melT
               + 2 * TM * Mp * 4                  # output blocks (f32)
               + 2 * TM * max(hop, 128) * it      # span scratch (lane-padded)
               + 3 * TM * 2 * Fp * 4)             # y / mag intermediates
        vmem_limit = int(min(40 * 1024 * 1024,
                             max(16 * 1024 * 1024, est + 8 * 1024 * 1024)))

        kernel = _make_melspec_kernel(self.clamp, Fp, self.n_hops, hop, TM,
                                      self.compute_dtype)
        out = pl.pallas_call(
            kernel,
            out_shape=jax.ShapeDtypeStruct((B, t_tiles * TM, Mp), jnp.float32),
            grid_spec=pltpu.PrefetchScalarGridSpec(
                num_scalar_prefetch=0,
                grid=(B, t_tiles),
                in_specs=[
                    # current TM chunks and the next TM chunks: together they
                    # cover the (TM-1)*hop + n_fft_eff sample span of the tile
                    pl.BlockSpec((1, TM, hop), lambda b, i: (b, i, 0)),
                    pl.BlockSpec((1, TM, hop), lambda b, i: (b, i + 1, 0)),
                    _const_spec((self.n_fft_eff, 2 * Fp)),
                    _const_spec((Fp, Mp)),
                ],
                out_specs=pl.BlockSpec((1, TM, Mp), lambda b, i: (b, i, 0)),
                scratch_shapes=[pltpu.VMEM((2 * TM, hop), self.compute_dtype)],
            ),
            compiler_params=pltpu.CompilerParams(
                dimension_semantics=("parallel", "parallel"),
                vmem_limit_bytes=vmem_limit),
        )(chunks, chunks, self.W, self.melT)

        out = out[:, :n_frames, :self.n_mel_channels]
        # TODO(synk): the final transpose could be folded into the kernel by
        # storing (Mp, TM) blocks (XLU transpose, idle slot); kept in the
        # wrapper for robustness -- it is one cheap pass over the small output.
        return jnp.transpose(out, (0, 2, 1))      # (B, n_mel_channels, T)

    # pure-JAX mirror of the kernel math (same dtype path) -- used as a
    # numerical sanity check against the kernel.
    def reference(self, audio):
        B, L = audio.shape
        hop = self.hop_length
        pad = self.n_fft // 2
        Fp = self.n_freq_pad
        n_frames = self._num_frames(L)
        ap = jnp.pad(audio, ((0, 0), (pad, pad)), mode="reflect")
        ap = ap.astype(self.compute_dtype)
        need = (n_frames - 1) * hop + self.n_fft_eff
        if need > ap.shape[1]:
            ap = jnp.pad(ap, ((0, 0), (0, need - ap.shape[1])))
        idx = (jnp.arange(n_frames)[:, None] * hop
               + jnp.arange(self.n_fft_eff)[None, :])
        frames = ap[:, idx]                                  # (B, T, n_fft_eff)
        y = jnp.einsum("btn,nf->btf", frames, self.W,
                       preferred_element_type=jnp.float32)
        re, im = y[..., :Fp], y[..., Fp:]
        mag = jnp.sqrt(re * re + im * im)
        mel = jnp.einsum("btf,fm->btm", mag.astype(self.compute_dtype),
                         self.melT, preferred_element_type=jnp.float32)
        out = jnp.log(jnp.maximum(mel, self.clamp))[..., :self.n_mel_channels]
        return jnp.transpose(out, (0, 2, 1))


if __name__ == "__main__":
    key = jax.random.PRNGKey(0)

    # Small but consistent shapes: n_fft == win_length = 128 -> 65 freq bins
    # (padded to 128 lanes), hop = 32, audio length 256 -> 9 frames,
    # 32 mel channels (padded to 128 lanes), batch 2.
    B, L = 2, 256
    msp = MelSpectrogramPallas(
        n_mel_channels=32, sample_rate=16000,
        win_length=128, hop_length=32, n_fft=128,
        mel_fmin=30, mel_fmax=8000, clamp=1e-5)

    audio = jax.random.normal(key, (B, L), dtype=jnp.float32)

    out = jax.block_until_ready(msp(audio))
    ref = jax.block_until_ready(msp.reference(audio))

    assert out.shape == (B, 32, 1 + L // 32), out.shape
    assert bool(jnp.isfinite(out).all())
    err = float(jnp.max(jnp.abs(out - ref)))
    assert err < 2e-3, err
    print("KERNEL_OK")
</pallas_src>

<mosaic_0001>
module attributes {stable_mosaic.version = 11 : i64} {
  func.func @kernel(%arg0: i32, %arg1: i32, %arg2: memref<1x16x32xbf16, #tpu.memory_space<vmem>>, %arg3: memref<1x16x32xbf16, #tpu.memory_space<vmem>>, %arg4: memref<128x256xbf16, #tpu.memory_space<vmem>>, %arg5: memref<128x128xbf16, #tpu.memory_space<vmem>>, %arg6: memref<1x16x128xf32, #tpu.memory_space<vmem>>, %arg7: memref<32x32xbf16, #tpu.memory_space<vmem>>) attributes {dimension_semantics = [#tpu.dimension_semantics<parallel>, #tpu.dimension_semantics<parallel>], iteration_bounds = array<i64: 2, 1>, scalar_prefetch = 0 : i64, scratch_operands = 1 : i64, tpu.core_type = #tpu.core_type<tc>, window_params = [{transform_indices = @transform_0, window_bounds = array<i64: 1, 16, 32>}, {transform_indices = @transform_1, window_bounds = array<i64: 1, 16, 32>}, {pipeline_mode = #tpu.pipeline_mode<synchronous>, transform_indices = @transform_2, window_bounds = array<i64: 128, 256>}, {pipeline_mode = #tpu.pipeline_mode<synchronous>, transform_indices = @transform_3, window_bounds = array<i64: 128, 128>}, {transform_indices = @transform_4, window_bounds = array<i64: 1, 16, 128>}]} {
    %c0 = arith.constant 0 : index
    %c0_0 = arith.constant 0 : index
    %c0_1 = arith.constant 0 : index
    %0 = vector.load %arg2[%c0, %c0_0, %c0_1] : memref<1x16x32xbf16, #tpu.memory_space<vmem>>, vector<1x16x32xbf16>
    %1 = vector.shape_cast %0 : vector<1x16x32xbf16> to vector<16x32xbf16>
    %c0_2 = arith.constant 0 : index
    %c0_3 = arith.constant 0 : index
    %2 = vector.load %arg7[%c0_2, %c0_3] : memref<32x32xbf16, #tpu.memory_space<vmem>>, vector<16x32xbf16>
    tpu.vector_store %arg7[%c0_2, %c0_3], %1 {strides = array<i32>} : memref<32x32xbf16, #tpu.memory_space<vmem>>, vector<16x32xbf16>,
    %c0_4 = arith.constant 0 : index
    %c0_5 = arith.constant 0 : index
    %c0_6 = arith.constant 0 : index
    %3 = vector.load %arg3[%c0_4, %c0_5, %c0_6] : memref<1x16x32xbf16, #tpu.memory_space<vmem>>, vector<1x16x32xbf16>
    %4 = vector.shape_cast %3 : vector<1x16x32xbf16> to vector<16x32xbf16>
    %c16 = arith.constant 16 : index
    %c0_7 = arith.constant 0 : index
    %5 = vector.load %arg7[%c16, %c0_7] : memref<32x32xbf16, #tpu.memory_space<vmem>>, vector<16x32xbf16>
    tpu.vector_store %arg7[%c16, %c0_7], %4 {strides = array<i32>} : memref<32x32xbf16, #tpu.memory_space<vmem>>, vector<16x32xbf16>,
    %c0_8 = arith.constant 0 : index
    %c0_9 = arith.constant 0 : index
    %6 = vector.load %arg7[%c0_8, %c0_9] : memref<32x32xbf16, #tpu.memory_space<vmem>>, vector<16x32xbf16>
    %c0_10 = arith.constant 0 : index
    %c0_11 = arith.constant 0 : index
    %7 = vector.load %arg4[%c0_10, %c0_11] : memref<128x256xbf16, #tpu.memory_space<vmem>>, vector<32x256xbf16>
    %cst = arith.constant dense<0.000000e+00> : vector<16x256xf32>
    %8 = tpu.matmul %6, %7, %cst {dimension_numbers = #tpu.dot_dimension_numbers<[1], [0], [0], [1], [0, 0, 1, 1], [], []>} : vector<16x32xbf16>, vector<32x256xbf16>, vector<16x256xf32> -> vector<16x256xf32>
    %c1 = arith.constant 1 : index
    %c0_12 = arith.constant 0 : index
    %9 = vector.load %arg7[%c1, %c0_12] : memref<32x32xbf16, #tpu.memory_space<vmem>>, vector<16x32xbf16>
    %c32 = arith.constant 32 : index
    %c0_13 = arith.constant 0 : index
    %10 = vector.load %arg4[%c32, %c0_13] : memref<128x256xbf16, #tpu.memory_space<vmem>>, vector<32x256xbf16>
    %cst_14 = arith.constant dense<0.000000e+00> : vector<16x256xf32>
    %11 = tpu.matmul %9, %10, %cst_14 {dimension_numbers = #tpu.dot_dimension_numbers<[1], [0], [0], [1], [0, 0, 1, 1], [], []>} : vector<16x32xbf16>, vector<32x256xbf16>, vector<16x256xf32> -> vector<16x256xf32>
    %12 = arith.addf %8, %11 : vector<16x256xf32>
    %c2 = arith.constant 2 : index
    %c0_15 = arith.constant 0 : index
    %13 = vector.load %arg7[%c2, %c0_15] : memref<32x32xbf16, #tpu.memory_space<vmem>>, vector<16x32xbf16>
    %c64 = arith.constant 64 : index
    %c0_16 = arith.constant 0 : index
    %14 = vector.load %arg4[%c64, %c0_16] : memref<128x256xbf16, #tpu.memory_space<vmem>>, vector<32x256xbf16>
    %cst_17 = arith.constant dense<0.000000e+00> : vector<16x256xf32>
    %15 = tpu.matmul %13, %14, %cst_17 {dimension_numbers = #tpu.dot_dimension_numbers<[1], [0], [0], [1], [0, 0, 1, 1], [], []>} : vector<16x32xbf16>, vector<32x256xbf16>, vector<16x256xf32> -> vector<16x256xf32>
    %16 = arith.addf %12, %15 : vector<16x256xf32>
    %c3 = arith.constant 3 : index
    %c0_18 = arith.constant 0 : index
    %17 = vector.load %arg7[%c3, %c0_18] : memref<32x32xbf16, #tpu.memory_space<vmem>>, vector<16x32xbf16>
    %c96 = arith.constant 96 : index
    %c0_19 = arith.constant 0 : index
    %18 = vector.load %arg4[%c96, %c0_19] : memref<128x256xbf16, #tpu.memory_space<vmem>>, vector<32x256xbf16>
    %cst_20 = arith.constant dense<0.000000e+00> : vector<16x256xf32>
    %19 = tpu.matmul %17, %18, %cst_20 {dimension_numbers = #tpu.dot_dimension_numbers<[1], [0], [0], [1], [0, 0, 1, 1], [], []>} : vector<16x32xbf16>, vector<32x256xbf16>, vector<16x256xf32> -> vector<16x256xf32>
    %20 = arith.addf %16, %19 : vector<16x256xf32>
    %21 = vector.extract_strided_slice %20 {offsets = [0, 0], sizes = [16, 128], strides = [1, 1]} : vector<16x256xf32> to vector<16x128xf32>
    %22 = vector.extract_strided_slice %20 {offsets = [0, 128], sizes = [16, 128], strides = [1, 1]} : vector<16x256xf32> to vector<16x128xf32>
    %23 = arith.mulf %21, %21 : vector<16x128xf32>
    %24 = arith.mulf %22, %22 : vector<16x128xf32>
    %25 = arith.addf %23, %24 : vector<16x128xf32>
    %26 = math.sqrt %25 : vector<16x128xf32>
    %27 = arith.truncf %26 : vector<16x128xf32> to vector<16x128xbf16>
    %c0_21 = arith.constant 0 : index
    %c0_22 = arith.constant 0 : index
    %28 = vector.load %arg5[%c0_21, %c0_22] : memref<128x128xbf16, #tpu.memory_space<vmem>>, vector<128x128xbf16>
    %cst_23 = arith.constant dense<0.000000e+00> : vector<16x128xf32>
    %29 = tpu.matmul %27, %28, %cst_23 {dimension_numbers = #tpu.dot_dimension_numbers<[1], [0], [0], [1], [0, 0, 1, 1], [], []>} : vector<16x128xbf16>, vector<128x128xbf16>, vector<16x128xf32> -> vector<16x128xf32>
    %cst_24 = arith.constant 9.99999974E-6 : f32
    %30 = vector.broadcast %cst_24 : f32 to vector<16x128xf32>
    %31 = arith.maximumf %29, %30 : vector<16x128xf32>
    %32 = math.log %31 : vector<16x128xf32>
    %c0_25 = arith.constant 0 : index
    %c0_26 = arith.constant 0 : index
    %c0_27 = arith.constant 0 : index
    %33 = vector.load %arg6[%c0_25, %c0_26, %c0_27] : memref<1x16x128xf32, #tpu.memory_space<vmem>>, vector<1x16x128xf32>
    %34 = vector.shape_cast %33 : vector<1x16x128xf32> to vector<16x128xf32>
    %35 = vector.shape_cast %32 : vector<16x128xf32> to vector<1x16x128xf32>
    tpu.vector_store %arg6[%c0_25, %c0_26, %c0_27], %35 {strides = array<i32>} : memref<1x16x128xf32, #tpu.memory_space<vmem>>, vector<1x16x128xf32>,
    return
  }
  func.func @transform_0(%arg0: i32, %arg1: i32) -> (i32, i32, i32) {
    %c0_i32 = arith.constant 0 : i32
    %c0_i32_0 = arith.constant 0 : i32
    return %arg0, %arg1, %c0_i32 : i32, i32, i32
  }
  func.func @transform_1(%arg0: i32, %arg1: i32) -> (i32, i32, i32) {
    %c1_i32 = arith.constant 1 : i32
    %0 = arith.addi %arg1, %c1_i32 : i32
    %c0_i32 = arith.constant 0 : i32
    %c0_i32_0 = arith.constant 0 : i32
    return %arg0, %0, %c0_i32 : i32, i32, i32
  }
  func.func @transform_2(%arg0: i32, %arg1: i32) -> (i32, i32) {
    %c0_i32 = arith.constant 0 : i32
    %c0_i32_0 = arith.constant 0 : i32
    %c0_i32_1 = arith.constant 0 : i32
    return %c0_i32, %c0_i32_0 : i32, i32
  }
  func.func @transform_3(%arg0: i32, %arg1: i32) -> (i32, i32) {
    %c0_i32 = arith.constant 0 : i32
    %c0_i32_0 = arith.constant 0 : i32
    %c0_i32_1 = arith.constant 0 : i32
    return %c0_i32, %c0_i32_0 : i32, i32
  }
  func.func @transform_4(%arg0: i32, %arg1: i32) -> (i32, i32, i32) {
    %c0_i32 = arith.constant 0 : i32
    %c0_i32_0 = arith.constant 0 : i32
    return %arg0, %arg1, %c0_i32 : i32, i32, i32
  }
}

</mosaic_0001>

<llo_original>
// kernel: tpu_custom_call.1
$region0: #{tpu_custom_call.1}
  #allocation0 [shape = 'u32[]', space=smem, size = 0x4, offset = 0x4, fixed_abs, tag = 'smem constant byte address 0x4 - core index']
  #allocation1 [shape = 'u32[72,128]{1,0:T(1,128)}', space=vmem, size = 0x9000, scoped, tag = 'internal scratch']
  #allocation2 [shape = 'bf16[32,32]{1,0:T(8,128)(2,1)}', space=vmem, size = 0x2000, scoped, tag = 'scratch operand']
  %s0 = inlined_call_operand.hbm [shape: bf16[2,32,32], index: 0, kind: input, shape index: {}]
  %s1 = inlined_call_operand.hbm [shape: bf16[2,32,32], index: 1, kind: input, shape index: {}]
  %s2 = inlined_call_operand.hbm [shape: bf16[128,256], index: 2, kind: input, shape index: {}]
  %s3 = inlined_call_operand.hbm [shape: bf16[128,128], index: 3, kind: input, shape index: {}]
  %s4 = inlined_call_operand.hbm [shape: f32[2,16,128], index: 4, kind: output, shape index: {}]
  %s5 = sld [smem:[#allocation0]]
  $region65: #{tpu_custom_call.1} parent=0
    _
  %s7 = ssub.s32 1, %s5
  %s8 = scalar_select 0, %s7, %s5
  $region1: #{tpu_custom_call.1} parent=0
    #allocation3 [shape = 'u8[8192]{0}', space=vmem, size = 0x2000, scoped, tag = 'input window, operand 0']
    #allocation4 [shape = 's32[2]{0}', space=sflag, size = 0x8, scoped, tag = 'scoped memory for tpu_custom_call.1']
    #allocation5 [shape = 's32[2]{0}', space=sflag, size = 0x8, scoped, tag = 'scoped memory for tpu_custom_call.1']
    #allocation6 [shape = 'u8[8192]{0}', space=vmem, size = 0x2000, scoped, tag = 'input window, operand 1']
    #allocation7 [shape = 's32[2]{0}', space=sflag, size = 0x8, scoped, tag = 'scoped memory for tpu_custom_call.1']
    #allocation8 [shape = 'u8[65536]{0}', space=vmem, size = 0x10000, scoped, tag = 'input window, operand 2, single buffered']
    #allocation9 [shape = 'u8[32768]{0}', space=vmem, size = 0x8000, scoped, tag = 'input window, operand 3, single buffered']
    #allocation10 [shape = 's32[1]{0}', space=sflag, size = 0x4, scoped, tag = 'scoped memory for tpu_custom_call.1']
    #allocation11 [shape = 'u8[16384]{0}', space=vmem, size = 0x4000, scoped, tag = 'output window, operand 0']
    %9 = vsyncpa [#allocation4], 0
    %s10 = scalar_lea.sflag [#allocation4], 1
    %11 = vsyncpa %s10, 0
    %12 = vsyncpa [#allocation7], 0
    %s13 = scalar_lea.sflag [#allocation7], 1
    %14 = vsyncpa %s13, 0
    %15 = vsyncpa [#allocation10], 0
    %16 = vsyncpa [#allocation5], 0
    %s17 = scalar_lea.sflag [#allocation5], 1
    %18 = vsyncpa %s17, 0
    loop: start=0, step=1, limit=4
    $region2: #{tpu_custom_call.1} parent=1 // loop_pre_header
      _
    $region3: #{tpu_custom_call.1} parent=1 // loop_header
      %s20 = sphi 0, %s24
      %p21 = scmp.ge.s32.totalorder %s20, 4
      %s27 = sphi 0, %s39
      %s28 = sphi 0, %s35
      %s29 = sphi 0, %s27
      %s30 = sphi 0, %s28
      %s31 = sphi 0, %s29
      %s32 = sphi 0, %s30
      %s44 = sphi 0, %s46
      %s47 = sphi 0, %s44
      %s48 = sphi 0, %s47
      %s64 = sphi 0, %s48
      %s74 = sphi 0, %s76
      %s77 = sphi 0, %s74
      %s78 = sphi 0, %s77
      %s94 = sphi 0, %s78
      %s98 = sphi 0, %s98
      %s100 = sphi 0, %s98
      %s101 = sphi 0, %s100
      %s115 = sphi 0, %s101
      %s119 = sphi 0, %s119
      %s121 = sphi 0, %s119
      %s122 = sphi 0, %s121
      %s136 = sphi 0, %s122
      %s144 = sphi 0, %s146
      %s147 = sphi 0, %s144
      %s148 = sphi 0, %s147
      %s164 = sphi 0, %s148
    $region4: #{tpu_custom_call.1} parent=1 // loop_header_branch
      %23 = sbr.rel (%p21) target = $region8
    $region5: #{tpu_custom_call.1} parent=1 // loop_body
      %s25 = ssub.s32 %s20, 1
      %s26 = ssub.s32 %s20, 2
      %s33 = sadd.s32 1, %s28
      %p34 = scmp.ge.s32.totalorder %s33, 1
      %s35 = scalar_select %p34, 0, %s33
      %s36 = sadd.s32 1, %s27
      %s37 = scalar_select %p34, %s36, %s27
      %p38 = scmp.ge.s32.totalorder %s37, 2
      %s39 = scalar_select %p38, 0, %s37
      %s40 = ssub.s32 %s27, %s39
      %s41 = ssub.s32 %s28, %s35
      %s42 = sor.u32 %s40, %s41
      %p43 = scmp.eq.s32.totalorder %s42, 0
      %s45 = sadd.s32 %s44, 1
      %s46 = scalar_select %p43, %s44, %s45
      %p49 = pneg %p43
      %p50 = scmp.eq.s32.totalorder %s20, 1
      %p51 = por %p49, %p50
      %p52 = scmp.ne.s32.totalorder %s44, %s47
      %p53 = scmp.eq.s32.totalorder %s20, 0
      %p54 = por %p52, %p53
      %p55 = scmp.ne.s32.totalorder %s44, %s47
      %p56 = scmp.eq.s32.totalorder %s25, 1
      %p57 = por %p55, %p56
      %p58 = scmp.ne.s32.totalorder %s47, %s48
      %p59 = scmp.eq.s32.totalorder %s25, 0
      %p60 = por %p58, %p59
      %p61 = scmp.ne.s32.totalorder %s47, %s48
      %p62 = scmp.eq.s32.totalorder %s26, 1
      %p63 = por %p61, %p62
      %p65 = scmp.ne.s32.totalorder %s48, %s64
      %p66 = scmp.eq.s32.totalorder %s26, 0
      %p67 = por %p65, %p66
      %s68 = sadd.s32 %s28, 1
      %s69 = sadd.s32 %s35, 1
      %s70 = ssub.s32 %s27, %s39
      %s71 = ssub.s32 %s68, %s69
      %s72 = sor.u32 %s70, %s71
      %p73 = scmp.eq.s32.totalorder %s72, 0
      %s75 = sadd.s32 %s74, 1
      %s76 = scalar_select %p73, %s74, %s75
      %p79 = pneg %p73
      %p80 = scmp.eq.s32.totalorder %s20, 1
      %p81 = por %p79, %p80
      %p82 = scmp.ne.s32.totalorder %s74, %s77
      %p83 = scmp.eq.s32.totalorder %s20, 0
      %p84 = por %p82, %p83
      %p85 = scmp.ne.s32.totalorder %s74, %s77
      %p86 = scmp.eq.s32.totalorder %s25, 1
      %p87 = por %p85, %p86
      %p88 = scmp.ne.s32.totalorder %s77, %s78
      %p89 = scmp.eq.s32.totalorder %s25, 0
      %p90 = por %p88, %p89
      %p91 = scmp.ne.s32.totalorder %s77, %s78
      %p92 = scmp.eq.s32.totalorder %s26, 1
      %p93 = por %p91, %p92
      %p95 = scmp.ne.s32.totalorder %s78, %s94
      %p96 = scmp.eq.s32.totalorder %s26, 0
      %p97 = por %p95, %p96
      %s99 = sadd.s32 %s98, 1
      %p102 = scmp.eq.s32.totalorder %s20, 1
      %p103 = scmp.ne.s32.totalorder %s98, %s100
      %p104 = scmp.eq.s32.totalorder %s20, 0
      %p105 = por %p103, %p104
      %p106 = scmp.ne.s32.totalorder %s98, %s100
      %p107 = scmp.eq.s32.totalorder %s25, 1
      %p108 = por %p106, %p107
      %p109 = scmp.ne.s32.totalorder %s100, %s101
      %p110 = scmp.eq.s32.totalorder %s25, 0
      %p111 = por %p109, %p110
      %p112 = scmp.ne.s32.totalorder %s100, %s101
      %p113 = scmp.eq.s32.totalorder %s26, 1
      %p114 = por %p112, %p113
      %p116 = scmp.ne.s32.totalorder %s101, %s115
      %p117 = scmp.eq.s32.totalorder %s26, 0
      %p118 = por %p116, %p117
      %s120 = sadd.s32 %s119, 1
      %p123 = scmp.eq.s32.totalorder %s20, 1
      %p124 = scmp.ne.s32.totalorder %s119, %s121
      %p125 = scmp.eq.s32.totalorder %s20, 0
      %p126 = por %p124, %p125
      %p127 = scmp.ne.s32.totalorder %s119, %s121
      %p128 = scmp.eq.s32.totalorder %s25, 1
      %p129 = por %p127, %p128
      %p130 = scmp.ne.s32.totalorder %s121, %s122
      %p131 = scmp.eq.s32.totalorder %s25, 0
      %p132 = por %p130, %p131
      %p133 = scmp.ne.s32.totalorder %s121, %s122
      %p134 = scmp.eq.s32.totalorder %s26, 1
      %p135 = por %p133, %p134
      %p137 = scmp.ne.s32.totalorder %s122, %s136
      %p138 = scmp.eq.s32.totalorder %s26, 0
      %p139 = por %p137, %p138
      %s140 = ssub.s32 %s27, %s39
      %s141 = ssub.s32 %s28, %s35
      %s142 = sor.u32 %s140, %s141
      %p143 = scmp.eq.s32.totalorder %s142, 0
      %s145 = sadd.s32 %s144, 1
      %s146 = scalar_select %p143, %s144, %s145
      %p149 = pneg %p143
      %p150 = scmp.eq.s32.totalorder %s20, 1
      %p151 = por %p149, %p150
      %p152 = scmp.ne.s32.totalorder %s144, %s147
      %p153 = scmp.eq.s32.totalorder %s20, 0
      %p154 = por %p152, %p153
      %p155 = scmp.ne.s32.totalorder %s144, %s147
      %p156 = scmp.eq.s32.totalorder %s25, 1
      %p157 = por %p155, %p156
      %p158 = scmp.ne.s32.totalorder %s147, %s148
      %p159 = scmp.eq.s32.totalorder %s25, 0
      %p160 = por %p158, %p159
      %p161 = scmp.ne.s32.totalorder %s147, %s148
      %p162 = scmp.eq.s32.totalorder %s26, 1
      %p163 = por %p161, %p162
      %p165 = scmp.ne.s32.totalorder %s148, %s164
      %p166 = scmp.eq.s32.totalorder %s26, 0
      %p167 = por %p165, %p166
      %p168 = scmp.le.s32.totalorder 1, %s20
      %p169 = scmp.lt.s32.totalorder %s20, 3
      %p170 = pnand %p168, %p169
      %p171 = pneg %p170
      // Predicated region
      $region9: #{tpu_custom_call.1} parent=5 // pred_check
        _
      $region10: #{tpu_custom_call.1} parent=5 // pred_check_branch
        %173 = sbr.rel (%p170) target = $region12
      $region11: #{tpu_custom_call.1} parent=5 // pred_region
        %s174 = ssub.s32 %s20, 1
        // Predicated region
        $region13: #{tpu_custom_call.1} parent=11 // pred_check
          %p175 = pneg %p111
        $region14: #{tpu_custom_call.1} parent=11 // pred_check_branch
          %177 = sbr.rel (%p175) target = $region16
        $region15: #{tpu_custom_call.1} parent=11 // pred_region
          %179 = vsyncadd [#allocation7], 0
          %s180 = sshll.u32 %s2, 4
          %s181 = int_to_ptr.hbm [resolvable:$true] %s180
          %s182 = sshll.u32 [#allocation8], 4
          %s183 = int_to_ptr.vmem [resolvable:$true] %s182
          %188 = dma.hbm_to_vmem [thread:$0]  %s181, 2048, %s183, [#allocation7], 128, 128, 8
        $region16: #{tpu_custom_call.1} parent=11 // pred_fallthru
          _
        // Predicated region
        $region17: #{tpu_custom_call.1} parent=11 // pred_check
          %p189 = pneg %p132
        $region18: #{tpu_custom_call.1} parent=11 // pred_check_branch
          %191 = sbr.rel (%p189) target = $region20
        $region19: #{tpu_custom_call.1} parent=11 // pred_region
          %193 = vsyncadd [#allocation10], 0
          %s194 = sshll.u32 %s3, 4
          %s195 = int_to_ptr.hbm [resolvable:$true] %s194
          %s196 = sshll.u32 [#allocation9], 4
          %s197 = int_to_ptr.vmem [resolvable:$true] %s196
          %202 = dma.hbm_to_vmem [thread:$0]  %s195, 1024, %s197, [#allocation10], 64, 64, 4
        $region20: #{tpu_custom_call.1} parent=11 // pred_fallthru
          _
      $region12: #{tpu_custom_call.1} parent=5 // pred_fallthru
        _
      %p203 = scmp.lt.s32.totalorder %s20, 2
      // Predicated region
      $region21: #{tpu_custom_call.1} parent=5 // pred_check
        %p204 = pneg %p203
      $region22: #{tpu_custom_call.1} parent=5 // pred_check_branch
        %206 = sbr.rel (%p204) target = $region24
      $region23: #{tpu_custom_call.1} parent=5 // pred_region
        // Predicated region
        $region25: #{tpu_custom_call.1} parent=23 // pred_check
          %p207 = pneg %p54
        $region26: #{tpu_custom_call.1} parent=23 // pred_check_branch
          %209 = sbr.rel (%p207) target = $region28
        $region27: #{tpu_custom_call.1} parent=23 // pred_region
          %s210 = sand.u32 %s44, 1
          %s211 = scalar_lea.sflag [#allocation4], %s210
          %s212 = sand.u32 %s44, 1
          %s213 = smul.addr %s212, 8
          %s214 = scalar_lea.vmem [#allocation3], %s213
          %s215 = smul.u32 2, %s28
          %217 = vsyncadd %s211, 0
          %s218 = smul.addr %s27, 4
          %s219 = sadd.s32 %s215, %s218
          %s220 = smul.addr %s219, 4
          %s221 = scalar_lea.hbm %s0, %s220
          %s222 = sshll.u32 %s221, 4
          %s223 = int_to_ptr.hbm [resolvable:$true] %s222
          %s224 = sshll.u32 %s214, 4
          %s225 = int_to_ptr.vmem [resolvable:$true] %s224
          %230 = dma.hbm_to_vmem [thread:$0]  %s223, 128, %s225, %s211, 64, 64, 4
        $region28: #{tpu_custom_call.1} parent=23 // pred_fallthru
          _
        // Predicated region
        $region29: #{tpu_custom_call.1} parent=23 // pred_check
          %p231 = pneg %p84
        $region30: #{tpu_custom_call.1} parent=23 // pred_check_branch
          %233 = sbr.rel (%p231) target = $region32
        $region31: #{tpu_custom_call.1} parent=23 // pred_region
          %s234 = sand.u32 %s20, 1
          %s235 = scalar_lea.sflag [#allocation7], %s234
          %s236 = sand.u32 %s74, 1
          %s237 = smul.addr %s236, 8
          %s238 = scalar_lea.vmem [#allocation6], %s237
          %s239 = sadd.s32 %s28, 1
          %s240 = smul.u32 2, %s239
          %242 = vsyncadd %s235, 0
          %s243 = smul.addr %s27, 4
          %s244 = sadd.s32 %s240, %s243
          %s245 = smul.addr %s244, 4
          %s246 = scalar_lea.hbm %s1, %s245
          %s247 = sshll.u32 %s246, 4
          %s248 = int_to_ptr.hbm [resolvable:$true] %s247
          %s249 = sshll.u32 %s238, 4
          %s250 = int_to_ptr.vmem [resolvable:$true] %s249
          %255 = dma.hbm_to_vmem [thread:$0]  %s248, 128, %s250, %s235, 64, 64, 4
        $region32: #{tpu_custom_call.1} parent=23 // pred_fallthru
          _
      $region24: #{tpu_custom_call.1} parent=5 // pred_fallthru
        _
      %p256 = scmp.le.s32.totalorder 1, %s20
      %p257 = scmp.lt.s32.totalorder %s20, 3
      %p258 = pnand %p256, %p257
      %p259 = pneg %p258
      // Predicated region
      $region33: #{tpu_custom_call.1} parent=5 // pred_check
        _
      $region34: #{tpu_custom_call.1} parent=5 // pred_check_branch
        %261 = sbr.rel (%p258) target = $region36
      $region35: #{tpu_custom_call.1} parent=5 // pred_region
        %s262 = ssub.s32 %s20, 1
        %s263 = sand.u32 %s47, 1
        %s264 = scalar_lea.sflag [#allocation4], %s263
        %s265 = sand.u32 %s47, 1
        %s266 = smul.addr %s265, 8
        %s267 = scalar_lea.vmem [#allocation3], %s266
        // Predicated region
        $region37: #{tpu_custom_call.1} parent=35 // pred_check
          %p268 = pneg %p60
        $region38: #{tpu_custom_call.1} parent=35 // pred_check_branch
          %270 = sbr.rel (%p268) target = $region40
        $region39: #{tpu_custom_call.1} parent=35 // pred_region
          %272 = dma.done %s264, 128
        $region40: #{tpu_custom_call.1} parent=35 // pred_fallthru
          _
        %s273 = sand.u32 %s25, 1
        %s274 = scalar_lea.sflag [#allocation7], %s273
        %s275 = sand.u32 %s77, 1
        %s276 = smul.addr %s275, 8
        %s277 = scalar_lea.vmem [#allocation6], %s276
        // Predicated region
        $region41: #{tpu_custom_call.1} parent=35 // pred_check
          %p278 = pneg %p90
        $region42: #{tpu_custom_call.1} parent=35 // pred_check_branch
          %280 = sbr.rel (%p278) target = $region44
        $region43: #{tpu_custom_call.1} parent=35 // pred_region
          %282 = dma.done %s274, 128
        $region44: #{tpu_custom_call.1} parent=35 // pred_fallthru
          _
        // Predicated region
        $region45: #{tpu_custom_call.1} parent=35 // pred_check
          %p283 = pneg %p111
        $region46: #{tpu_custom_call.1} parent=35 // pred_check_branch
          %285 = sbr.rel (%p283) target = $region48
        $region47: #{tpu_custom_call.1} parent=35 // pred_region
          %287 = dma.done [#allocation7], 2048
        $region48: #{tpu_custom_call.1} parent=35 // pred_fallthru
          _
        // Predicated region
        $region49: #{tpu_custom_call.1} parent=35 // pred_check
          %p288 = pneg %p132
        $region50: #{tpu_custom_call.1} parent=35 // pred_check_branch
          %290 = sbr.rel (%p288) target = $region52
        $region51: #{tpu_custom_call.1} parent=35 // pred_region
          %292 = dma.done [#allocation10], 1024
        $region52: #{tpu_custom_call.1} parent=35 // pred_fallthru
          _
        %s293 = sand.u32 %s47, 1
        %s294 = scalar_lea.sflag [#allocation4], %s293
        %s295 = sand.u32 %s47, 1
        %s296 = smul.addr %s295, 8
        %s297 = scalar_lea.vmem [#allocation3], %s296
        %p298 = pneg %p60
        %p299 = pneg %p57
        %s300 = sand.u32 %s25, 1
        %s301 = scalar_lea.sflag [#allocation7], %s300
        %s302 = sand.u32 %s77, 1
        %s303 = smul.addr %s302, 8
        %s304 = scalar_lea.vmem [#allocation6], %s303
        %p305 = pneg %p90
        %p306 = pneg %p87
        %p307 = pneg %p111
        %p308 = pneg %p108
        %p309 = pneg %p132
        %p310 = pneg %p129
        %p311 = pneg %p160
        %p312 = pneg %p157
        %s313 = sand.u32 %s147, 1
        %s314 = scalar_lea.sflag [#allocation5], %s313
        %s315 = sand.u32 %s147, 1
        %s316 = smul.addr %s315, 16
        %s317 = scalar_lea.vmem [#allocation11], %s316
        %s318 = smul.u32 2, %s30
        %s319 = sadd.s32 %s30, 1
        %s320 = smul.u32 2, %s319
        %s321 = smul.u32 2, %s30
        %v323 = vld [vmem:[%s267] sm:$0xf]
        %v324 = vld [vmem:[%s267 + $0x4] sm:$0xf]
        %vm325 = vcmask 257024
        %326 = vst.msk [vmem:[#allocation2] sm:$0xf] %vm325, %v323
        %327 = vst.msk [vmem:[#allocation2 + $0x4] sm:$0xf] %vm325, %v324
        %v328 = vld [vmem:[%s277] sm:$0xf]
        %v329 = vld [vmem:[%s277 + $0x4] sm:$0xf]
        %330 = vst.msk [vmem:[#allocation2 + $0x8] sm:$0xf] %vm325, %v328
        %331 = vst.msk [vmem:[#allocation2 + $0xc] sm:$0xf] %vm325, %v329
        %v332 = vld [vmem:[#allocation2] sm:$0xf]
        %v333 = vld [vmem:[#allocation2 + $0x4] sm:$0xf]
        %v334 = vld [vmem:[#allocation8] sm:$0xff]
        %v335 = vld [vmem:[#allocation8 + $0x8] sm:$0xff]
        %v336 = vld [vmem:[#allocation8 + $0x10] sm:$0xff]
        %v337 = vld [vmem:[#allocation8 + $0x18] sm:$0xff]
        %v338 = vld [vmem:[#allocation2 + $0x8] sm:$0x1]
        %v339 = vld [vmem:[#allocation8 + $0x20] sm:$0xff]
        %v340 = vld [vmem:[#allocation8 + $0x28] sm:$0xff]
        %v341 = vld [vmem:[#allocation8 + $0x30] sm:$0xff]
        %v342 = vld [vmem:[#allocation8 + $0x38] sm:$0xff]
        %v346 = vunpack.c.l.b16 %v332
        %v347 = vunpack.c.l.b16 %v333
        %v348 = vunpack.c.l.b16 %v338
        %v349 = vpack.c.b16 %v347, %v346
        %v350 = vpack.c.b16 %v348, %v348
        %vm351 = vsmask.f32 7424
        %v353 = vshrl.u32 %v349, 16
        %v355 = vshll.u32 %v349, 16
        %v357 = vrot.slane %v355, 1
        %v358 = vor.u32 %v353, %v357
        %v360 = vshll.u32 %v350, 16
        %v362 = vrot.slane %v360, 1
        %v363 = vsel %vm351, %v358, %v362
        %v368 = vunpack.c.l.b16 %v339
        %v369 = vunpack.c.h.b16 %v339
        %v370 = vunpack.c.l.b16 %v340
        %v371 = vunpack.c.h.b16 %v340
        %v372 = vunpack.c.l.b16 %v341
        %v373 = vunpack.c.h.b16 %v341
        %v374 = vunpack.c.l.b16 %v342
        %v375 = vunpack.c.h.b16 %v342
        %v376 = vpack.c.b16 %v370, %v368
        %v377 = vpack.c.b16 %v371, %v369
        %v378 = vpack.c.b16 %v374, %v372
        %v379 = vpack.c.b16 %v375, %v373
        %vm384 = vcmask 261120
        %v386 = vsel %vm384, %v363, 0
        %388 = vmatpush.bf16.msra.mxu0 0
        %389 = vmatpush.bf16.msra.mxu0 0
        %390 = vmatpush.bf16.msra.mxu0 0
        %391 = vmatpush.bf16.msra.mxu0 0
        %392 = vmatpush.bf16.msra.mxu0 0
        %393 = vmatpush.bf16.msra.mxu0 0
        %394 = vmatpush.bf16.msra.mxu0 %v378
        %395 = vmatpush.bf16.msra.mxu0 %v376
        %396 = vmatmul.bf16.gmra.mxu0 %v386
        %v397 = vpop.f32.mrf.mxu0
        %v398 = vadd.f32 0.0, %v397
        %v399 = vpop.f32.mrf.mxu0
        %v400 = vadd.f32 0.0, %v399
        %401 = vdwg.mxu0
        %402 = vmatpush.bf16.msra.mxu0 0
        %403 = vmatpush.bf16.msra.mxu0 0
        %404 = vmatpush.bf16.msra.mxu0 0
        %405 = vmatpush.bf16.msra.mxu0 0
        %406 = vmatpush.bf16.msra.mxu0 0
        %407 = vmatpush.bf16.msra.mxu0 0
        %408 = vmatpush.bf16.msra.mxu0 %v379
        %409 = vmatpush.bf16.msra.mxu0 %v377
        %410 = vmatmul.bf16.gmra.mxu0 %v386
        %v411 = vpop.f32.mrf.mxu0
        %v412 = vadd.f32 0.0, %v411
        %v413 = vpop.f32.mrf.mxu0
        %v414 = vadd.f32 0.0, %v413
        %415 = vdwg.mxu0
        %v420 = vunpack.c.l.b16 %v334
        %v421 = vunpack.c.h.b16 %v334
        %v422 = vunpack.c.l.b16 %v335
        %v423 = vunpack.c.h.b16 %v335
        %v424 = vunpack.c.l.b16 %v336
        %v425 = vunpack.c.h.b16 %v336
        %v426 = vunpack.c.l.b16 %v337
        %v427 = vunpack.c.h.b16 %v337
        %v428 = vpack.c.b16 %v422, %v420
        %v429 = vpack.c.b16 %v423, %v421
        %v430 = vpack.c.b16 %v426, %v424
        %v431 = vpack.c.b16 %v427, %v425
        %v436 = vsel %vm384, %v349, 0
        %438 = vmatpush.bf16.msra.mxu0 0
        %439 = vmatpush.bf16.msra.mxu0 0
        %440 = vmatpush.bf16.msra.mxu0 0
        %441 = vmatpush.bf16.msra.mxu0 0
        %442 = vmatpush.bf16.msra.mxu0 0
        %443 = vmatpush.bf16.msra.mxu0 0
        %444 = vmatpush.bf16.msra.mxu0 %v430
        %445 = vmatpush.bf16.msra.mxu0 %v428
        %446 = vmatmul.bf16.gmra.mxu0 %v436
        %v447 = vpop.f32.mrf.mxu0
        %v448 = vadd.f32 %v398, %v447
        %v449 = vpop.f32.mrf.mxu0
        %v450 = vadd.f32 %v400, %v449
        %451 = vdwg.mxu0
        %452 = vmatpush.bf16.msra.mxu0 0
        %453 = vmatpush.bf16.msra.mxu0 0
        %454 = vmatpush.bf16.msra.mxu0 0
        %455 = vmatpush.bf16.msra.mxu0 0
        %456 = vmatpush.bf16.msra.mxu0 0
        %457 = vmatpush.bf16.msra.mxu0 0
        %458 = vmatpush.bf16.msra.mxu0 %v431
        %459 = vmatpush.bf16.msra.mxu0 %v429
        %460 = vmatmul.bf16.gmra.mxu0 %v436
        %v461 = vpop.f32.mrf.mxu0
        %v462 = vadd.f32 %v412, %v461
        %v463 = vpop.f32.mrf.mxu0
        %v464 = vadd.f32 %v414, %v463
        %465 = vdwg.mxu0
        %v466 = vld [vmem:[#allocation2] sm:$0xe]
        %v467 = vld [vmem:[#allocation8 + $0x40] sm:$0xff]
        %v468 = vld [vmem:[#allocation8 + $0x48] sm:$0xff]
        %v469 = vld [vmem:[#allocation8 + $0x50] sm:$0xff]
        %v470 = vld [vmem:[#allocation8 + $0x58] sm:$0xff]
        %v472 = vunpack.c.l.b16 %v466
        %v473 = vpack.c.b16 %v347, %v472
        %vm474 = vcmask 1046528
        %v475 = vrot.slane %v473, 1
        %v476 = vrot.slane %v350, 1
        %v477 = vsel %vm474, %v475, %v476
        %v482 = vunpack.c.l.b16 %v467
        %v483 = vunpack.c.h.b16 %v467
        %v484 = vunpack.c.l.b16 %v468
        %v485 = vunpack.c.h.b16 %v468
        %v486 = vunpack.c.l.b16 %v469
        %v487 = vunpack.c.h.b16 %v469
        %v488 = vunpack.c.l.b16 %v470
        %v489 = vunpack.c.h.b16 %v470
        %v490 = vpack.c.b16 %v484, %v482
        %v491 = vpack.c.b16 %v485, %v483
        %v492 = vpack.c.b16 %v488, %v486
        %v493 = vpack.c.b16 %v489, %v487
        %v499 = vsel %vm384, %v477, 0
        %501 = vmatpush.bf16.msra.mxu0 0
        %502 = vmatpush.bf16.msra.mxu0 0
        %503 = vmatpush.bf16.msra.mxu0 0
        %504 = vmatpush.bf16.msra.mxu0 0
        %505 = vmatpush.bf16.msra.mxu0 0
        %506 = vmatpush.bf16.msra.mxu0 0
        %507 = vmatpush.bf16.msra.mxu0 %v492
        %508 = vmatpush.bf16.msra.mxu0 %v490
        %509 = vmatmul.bf16.gmra.mxu0 %v499
        %v510 = vpop.f32.mrf.mxu0
        %v511 = vadd.f32 0.0, %v510
        %v512 = vpop.f32.mrf.mxu0
        %v513 = vadd.f32 0.0, %v512
        %514 = vdwg.mxu0
        %515 = vmatpush.bf16.msra.mxu0 0
        %516 = vmatpush.bf16.msra.mxu0 0
        %517 = vmatpush.bf16.msra.mxu0 0
        %518 = vmatpush.bf16.msra.mxu0 0
        %519 = vmatpush.bf16.msra.mxu0 0
        %520 = vmatpush.bf16.msra.mxu0 0
        %521 = vmatpush.bf16.msra.mxu0 %v493
        %522 = vmatpush.bf16.msra.mxu0 %v491
        %523 = vmatmul.bf16.gmra.mxu0 %v499
        %v524 = vpop.f32.mrf.mxu0
        %v525 = vadd.f32 0.0, %v524
        %v526 = vpop.f32.mrf.mxu0
        %v527 = vadd.f32 0.0, %v526
        %528 = vdwg.mxu0
        %v529 = vadd.f32 %v448, %v511
        %v530 = vadd.f32 %v462, %v525
        %v531 = vadd.f32 %v450, %v513
        %v532 = vadd.f32 %v464, %v527
        %v533 = vld [vmem:[#allocation2 + $0x8] sm:$0x3]
        %v534 = vld [vmem:[#allocation8 + $0x60] sm:$0xff]
        %v535 = vld [vmem:[#allocation8 + $0x68] sm:$0xff]
        %v536 = vld [vmem:[#allocation8 + $0x70] sm:$0xff]
        %v537 = vld [vmem:[#allocation8 + $0x78] sm:$0xff]
        %v539 = vunpack.c.l.b16 %v533
        %v540 = vpack.c.b16 %v539, %v539
        %vm541 = vsmask.f32 6400
        %v543 = vshrl.u32 %v473, 16
        %v545 = vrot.slane %v543, 1
        %v546 = vshll.u32 %v473, 16
        %v548 = vrot.slane %v546, 2
        %v549 = vor.u32 %v545, %v548
        %v551 = vshrl.u32 %v540, 16
        %v553 = vrot.slane %v551, 1
        %v554 = vshll.u32 %v540, 16
        %v556 = vrot.slane %v554, 2
        %v557 = vor.u32 %v553, %v556
        %v558 = vsel %vm541, %v549, %v557
        %v563 = vunpack.c.l.b16 %v534
        %v564 = vunpack.c.h.b16 %v534
        %v565 = vunpack.c.l.b16 %v535
        %v566 = vunpack.c.h.b16 %v535
        %v567 = vunpack.c.l.b16 %v536
        %v568 = vunpack.c.h.b16 %v536
        %v569 = vunpack.c.l.b16 %v537
        %v570 = vunpack.c.h.b16 %v537
        %v571 = vpack.c.b16 %v565, %v563
        %v572 = vpack.c.b16 %v566, %v564
        %v573 = vpack.c.b16 %v569, %v567
        %v574 = vpack.c.b16 %v570, %v568
        %v580 = vsel %vm384, %v558, 0
        %582 = vmatpush.bf16.msra.mxu0 0
        %583 = vmatpush.bf16.msra.mxu0 0
        %584 = vmatpush.bf16.msra.mxu0 0
        %585 = vmatpush.bf16.msra.mxu0 0
        %586 = vmatpush.bf16.msra.mxu0 0
        %587 = vmatpush.bf16.msra.mxu0 0
        %588 = vmatpush.bf16.msra.mxu0 %v573
        %589 = vmatpush.bf16.msra.mxu0 %v571
        %590 = vmatmul.bf16.gmra.mxu0 %v580
        %v591 = vpop.f32.mrf.mxu0
        %v592 = vadd.f32 0.0, %v591
        %v593 = vpop.f32.mrf.mxu0
        %v594 = vadd.f32 0.0, %v593
        %595 = vdwg.mxu0
        %596 = vmatpush.bf16.msra.mxu0 0
        %597 = vmatpush.bf16.msra.mxu0 0
        %598 = vmatpush.bf16.msra.mxu0 0
        %599 = vmatpush.bf16.msra.mxu0 0
        %600 = vmatpush.bf16.msra.mxu0 0
        %601 = vmatpush.bf16.msra.mxu0 0
        %602 = vmatpush.bf16.msra.mxu0 %v574
        %603 = vmatpush.bf16.msra.mxu0 %v572
        %604 = vmatmul.bf16.gmra.mxu0 %v580
        %v605 = vpop.f32.mrf.mxu0
        %v606 = vadd.f32 0.0, %v605
        %v607 = vpop.f32.mrf.mxu0
        %v608 = vadd.f32 0.0, %v607
        %609 = vdwg.mxu0
        %v610 = vadd.f32 %v529, %v592
        %v611 = vadd.f32 %v530, %v606
        %v612 = vadd.f32 %v531, %v594
        %v613 = vadd.f32 %v532, %v608
        %v614 = vmul.f32 %v610, %v610
        %v615 = vmul.f32 %v612, %v612
        %v616 = vmul.f32 %v611, %v611
        %v617 = vmul.f32 %v613, %v613
        %v618 = vadd.f32 %v614, %v616
        %v619 = vadd.f32 %v615, %v617
        %v620 = vrsqrt.pop %v618
        %v621 = vmul.f32 %v620, %v618
        %v622 = vmul.f32 %v621, %v620
        %v623 = vmul.f32 0.5, %v622
        %v624 = vsub.f32 1.5, %v623
        %v625 = vmul.f32 %v620, %v624
        %v626 = vmul.f32 %v618, %v625
        %vm627 = vcmp.eq.f32.partialorder %v618, inf
        %v628 = vsel %vm627, %v618, %v626
        %vm629 = vcmp.eq.f32.partialorder %v618, 0.0
        %v630 = vand.u32 %v618, 2147483648
        %v631 = vsel %vm629, %v630, %v628
        %v632 = vrsqrt.pop %v619
        %v633 = vmul.f32 %v632, %v619
        %v634 = vmul.f32 %v633, %v632
        %v635 = vmul.f32 0.5, %v634
        %v636 = vsub.f32 1.5, %v635
        %v637 = vmul.f32 %v632, %v636
        %v638 = vmul.f32 %v619, %v637
        %vm639 = vcmp.eq.f32.partialorder %v619, inf
        %v640 = vsel %vm639, %v619, %v638
        %vm641 = vcmp.eq.f32.partialorder %v619, 0.0
        %v642 = vand.u32 %v619, 2147483648
        %v643 = vsel %vm641, %v642, %v640
        %v644 = vpack.c.bf16 %v643, %v631
        %v645 = vld [vmem:[#allocation9] sm:$0xf]
        %v646 = vld [vmem:[#allocation9 + $0x4] sm:$0xf]
        %v647 = vld [vmem:[#allocation9 + $0x8] sm:$0xf]
        %v648 = vld [vmem:[#allocation9 + $0xc] sm:$0xf]
        %v649 = vld [vmem:[#allocation9 + $0x10] sm:$0xf]
        %v650 = vld [vmem:[#allocation9 + $0x14] sm:$0xf]
        %v651 = vld [vmem:[#allocation9 + $0x18] sm:$0xf]
        %v652 = vld [vmem:[#allocation9 + $0x1c] sm:$0xf]
        %v653 = vld [vmem:[#allocation9 + $0x20] sm:$0xf]
        %v654 = vld [vmem:[#allocation9 + $0x24] sm:$0xf]
        %v655 = vld [vmem:[#allocation9 + $0x28] sm:$0xf]
        %v656 = vld [vmem:[#allocation9 + $0x2c] sm:$0xf]
        %v657 = vld [vmem:[#allocation9 + $0x30] sm:$0xf]
        %v658 = vld [vmem:[#allocation9 + $0x34] sm:$0xf]
        %v659 = vld [vmem:[#allocation9 + $0x38] sm:$0xf]
        %v660 = vld [vmem:[#allocation9 + $0x3c] sm:$0xf]
        %v677 = vunpack.c.l.b16 %v645
        %v678 = vunpack.c.l.b16 %v646
        %v679 = vunpack.c.l.b16 %v647
        %v680 = vunpack.c.l.b16 %v648
        %v681 = vunpack.c.l.b16 %v649
        %v682 = vunpack.c.l.b16 %v650
        %v683 = vunpack.c.l.b16 %v651
        %v684 = vunpack.c.l.b16 %v652
        %v685 = vunpack.c.l.b16 %v653
        %v686 = vunpack.c.l.b16 %v654
        %v687 = vunpack.c.l.b16 %v655
        %v688 = vunpack.c.l.b16 %v656
        %v689 = vunpack.c.l.b16 %v657
        %v690 = vunpack.c.l.b16 %v658
        %v691 = vunpack.c.l.b16 %v659
        %v692 = vunpack.c.l.b16 %v660
        %v693 = vpack.c.b16 %v678, %v677
        %v694 = vpack.c.b16 %v680, %v679
        %v695 = vpack.c.b16 %v682, %v681
        %v696 = vpack.c.b16 %v684, %v683
        %v697 = vpack.c.b16 %v686, %v685
        %v698 = vpack.c.b16 %v688, %v687
        %v699 = vpack.c.b16 %v690, %v689
        %v700 = vpack.c.b16 %v692, %v691
        %709 = vmatpush.bf16.msra.mxu0 %v700
        %710 = vmatpush.bf16.msra.mxu0 %v699
        %711 = vmatpush.bf16.msra.mxu0 %v698
        %712 = vmatpush.bf16.msra.mxu0 %v697
        %713 = vmatpush.bf16.msra.mxu0 %v696
        %714 = vmatpush.bf16.msra.mxu0 %v695
        %715 = vmatpush.bf16.msra.mxu0 %v694
        %716 = vmatpush.bf16.msra.mxu0 %v693
        %717 = vmatmul.bf16.gmra.mxu0 %v644
        %v718 = vpop.f32.mrf.mxu0
        %v719 = vadd.f32 0.0, %v718
        %v720 = vpop.f32.mrf.mxu0
        %v721 = vadd.f32 0.0, %v720
        %722 = vdwg.mxu0
        %v723 = vmax.f32 %v719, 1e-05
        %v724 = vmax.f32 %v721, 1e-05
        %v725 = vlog2.pop %v723
        %v726 = vmul.f32 %v725, 0.6931472
        %v727 = vlog2.pop %v724
        %v728 = vmul.f32 %v727, 0.6931472
        %729 = vst [vmem:[%s317] sm:$0xff] %v726
        %730 = vst [vmem:[%s317 + $0x8] sm:$0xff] %v728
        %s731 = sand.u32 %s147, 1
        %s732 = scalar_lea.sflag [#allocation5], %s731
        %s733 = sand.u32 %s147, 1
        %s734 = smul.addr %s733, 16
        %s735 = scalar_lea.vmem [#allocation11], %s734
        // Predicated region
        $region53: #{tpu_custom_call.1} parent=35 // pred_check
          %p736 = pneg %p157
        $region54: #{tpu_custom_call.1} parent=35 // pred_check_branch
          %738 = sbr.rel (%p736) target = $region56
        $region55: #{tpu_custom_call.1} parent=35 // pred_region
          %s739 = smul.u32 2, %s30
          %741 = vsyncadd %s732, 0
          %s742 = smul.addr %s29, 2
          %s743 = sadd.s32 %s739, %s742
          %s744 = smul.addr %s743, 8
          %s745 = scalar_lea.hbm %s4, %s744
          %s746 = sshll.u32 %s735, 4
          %s747 = int_to_ptr.vmem [resolvable:$true] %s746
          %s748 = sshll.u32 %s745, 4
          %s749 = int_to_ptr.hbm [resolvable:$true] %s748
          %754 = dma.vmem_to_hbm [thread:$0]  %s747, 256, %s749, %s732, 128, 128, 8
        $region56: #{tpu_custom_call.1} parent=35 // pred_fallthru
          _
      $region36: #{tpu_custom_call.1} parent=5 // pred_fallthru
        _
      %p755 = scmp.le.s32.totalorder 2, %s20
      // Predicated region
      $region57: #{tpu_custom_call.1} parent=5 // pred_check
        %p756 = pneg %p755
      $region58: #{tpu_custom_call.1} parent=5 // pred_check_branch
        %758 = sbr.rel (%p756) target = $region60
      $region59: #{tpu_custom_call.1} parent=5 // pred_region
        %s759 = ssub.s32 %s20, 2
        // Predicated region
        $region61: #{tpu_custom_call.1} parent=59 // pred_check
          %p760 = pneg %p163
        $region62: #{tpu_custom_call.1} parent=59 // pred_check_branch
          %762 = sbr.rel (%p760) target = $region64
        $region63: #{tpu_custom_call.1} parent=59 // pred_region
          %s763 = sand.u32 %s148, 1
          %s764 = scalar_lea.sflag [#allocation5], %s763
          %s765 = sand.u32 %s148, 1
          %s766 = smul.addr %s765, 16
          %s767 = scalar_lea.vmem [#allocation11], %s766
          %769 = dma.done %s764, 256
        $region64: #{tpu_custom_call.1} parent=59 // pred_fallthru
          _
      $region60: #{tpu_custom_call.1} parent=5 // pred_fallthru
        _
    $region6: #{tpu_custom_call.1} parent=1 // loop_footer
      %s24 = sadd.s32 1, %s20
    $region7: #{tpu_custom_call.1} parent=1 // loop_footer_branch
      %19 = sbr.rel target = $region3
    $region8: #{tpu_custom_call.1} parent=1 // loop_exit
      _
    %770 = vsyncpa [#allocation4], 1
    %s771 = scalar_lea.sflag [#allocation4], 1
    %772 = vsyncpa %s771, 1
    %773 = vsyncpa [#allocation7], 1
    %s774 = scalar_lea.sflag [#allocation7], 1
    %775 = vsyncpa %s774, 1
    %776 = vsyncpa [#allocation10], 1
    %777 = vsyncpa [#allocation5], 1
    %s778 = scalar_lea.sflag [#allocation5], 1
    %779 = vsyncpa %s778, 1

</llo_original>
